<compile_context>
chip_gen: v7x
topology: tpu7x:2x2x1
jax: 0.10.0
libtpu: 0.0.40
codegen_flags: <defaults>
</compile_context>

<pallas_src>
import functools

import jax
import jax.numpy as jnp
from jax.experimental import pallas as pl
from jax.experimental.pallas import tpu as pltpu


def _round_up(x, m):
    return ((x + m - 1) // m) * m


def _cdiv(a, b):
    return -(-a // b)


def _vmem_capacity_bytes():
    """Physical VMEM per core; conservative 64 MiB (v7x) fallback."""
    default = 64 * 1024 * 1024
    try:
        info = pltpu.get_tpu_info()
        cap = int(getattr(info, "vmem_capacity_bytes", default))
        return cap if cap > 0 else default
    except Exception:
        return default


def _choose_tile_n(n, c, itemsize, vmem_cap):
    """Largest row-tile whose *padded* VMEM working set fits ~half of VMEM.

    Per row of tile (bytes), counting lane padding:
      * node_logits input buffer : c_pad * itemsize, double buffered (x2)
      * node_labels input buffer : 128 lanes * 4 B = 512 B, double buffered (x2)
      * in-kernel f32 temporaries: ~3 live (tile_n, c_pad) f32 arrays
        (the f32 upcast, exp(nl - m), the one-hot/where product)
    """
    c_pad = _round_up(c, 128)
    budget = vmem_cap // 2
    per_row = 2 * (c_pad * itemsize + 512) + 3 * c_pad * 4
    t = (budget // per_row) // 16 * 16      # bf16 sublane tile is (16, 128)
    t = max(16, t)
    if n >= 16:
        # Never exceed N: only the LAST tile may be partial (standard padded
        # edge block), never a block wider than the whole array.
        t = min(t, (n // 16) * 16)
    else:
        t = n                                # tiny N: one block == full array
    return t


def _weighted_ce_kernel(flabel_ref, node_logits_ref, node_labels_ref,
                        graph_logits_ref, node_out_ref, func_out_ref, acc_ref,
                        *, n_rows, tile_n, n_classes, tiles_per_split):
    p = pl.program_id(0)          # parallel split (maps to a TensorCore on v7x)
    i = pl.program_id(1)          # sequential tile index within this split
    last = pl.num_programs(1) - 1

    @pl.when(i == 0)
    def _init():
        acc_ref[...] = jnp.zeros_like(acc_ref)

    # ---- node-level cross entropy: accumulate this tile's valid rows ----
    nl = node_logits_ref[...].astype(jnp.float32)          # (TILE_N, C) f32
    labels = node_labels_ref[...]                          # (TILE_N, 1) int32
    m = jnp.max(nl, axis=-1, keepdims=True)                # (TILE_N, 1)
    lse = jnp.log(jnp.sum(jnp.exp(nl - m), axis=-1, keepdims=True)) + m
    col = jax.lax.broadcasted_iota(jnp.int32, (tile_n, n_classes), 1)
    picked = jnp.sum(jnp.where(col == labels, nl, 0.0), axis=-1, keepdims=True)
    per_row = lse - picked                                 # (TILE_N, 1)

    # Mask rows past the true N.  Handles both the partial last tile and the
    # fully-masked clamped tiles of the trailing split (odd tile counts).
    g_tile = p * tiles_per_split + i                       # unclamped global tile
    row = g_tile * tile_n + jax.lax.broadcasted_iota(jnp.int32, (tile_n, 1), 0)
    per_row = jnp.where(row < n_rows, per_row, 0.0)
    # With MiB-scale tiles there are only a handful of grid steps, so the
    # single cross-sublane collapse per step is negligible.
    acc_ref[...] += jnp.sum(per_row, axis=0, keepdims=True)

    # ---- finalize (per split): partial node sum + graph-level CE ----
    @pl.when(i == last)
    def _finalize():
        gl = graph_logits_ref[...].astype(jnp.float32)     # (1, C)
        gm = jnp.max(gl, axis=-1, keepdims=True)
        glse = jnp.log(jnp.sum(jnp.exp(gl - gm), axis=-1, keepdims=True)) + gm
        gcol = jax.lax.broadcasted_iota(jnp.int32, (1, n_classes), 1)
        gpicked = jnp.sum(jnp.where(gcol == flabel_ref[0, 0], gl, 0.0),
                          axis=-1, keepdims=True)
        node_out_ref[...] = acc_ref[...].reshape(1, 1, 1)
        func_out_ref[...] = (glse - gpicked).reshape(1, 1, 1)


def learnable_weighted_loss(alpha, node_logits, node_labels, graph_logits,
                            func_label, *, tile_n=None):
    """alpha: scalar f32; node_logits: (N, C) f32/bf16; node_labels: (N,) int;
       graph_logits: (C,) f32/bf16; func_label: scalar int.  Returns f32 loss."""
    n, c = node_logits.shape

    # Accept bf16 directly (halves HBM traffic); anything else goes to f32.
    if node_logits.dtype not in (jnp.bfloat16, jnp.float32):
        node_logits = node_logits.astype(jnp.float32)
    graph_logits2 = jnp.asarray(graph_logits)
    if graph_logits2.dtype not in (jnp.bfloat16, jnp.float32):
        graph_logits2 = graph_logits2.astype(jnp.float32)
    graph_logits2 = graph_logits2.reshape(1, c)

    labels2 = node_labels.astype(jnp.int32).reshape(n, 1)
    flabel2 = jnp.asarray(func_label, jnp.int32).reshape(1, 1)

    vmem_cap = _vmem_capacity_bytes()
    if tile_n is None:
        tile_n = _choose_tile_n(n, c, node_logits.dtype.itemsize, vmem_cap)

    total_tiles = _cdiv(n, tile_n)
    n_split = 2 if total_tiles >= 2 else 1       # 2 TCs on v7x; serial elsewhere
    tiles_per_split = _cdiv(total_tiles, n_split)

    def tile_map(p, i):
        g = p * tiles_per_split + i
        # Clamp over-allocated trailing tiles back in range; their rows are
        # >= N so the in-kernel mask zeroes their contribution.
        return (jnp.minimum(g, total_tiles - 1), 0)

    kernel = functools.partial(_weighted_ce_kernel, n_rows=n, tile_n=tile_n,
                               n_classes=c, tiles_per_split=tiles_per_split)

    node_part, func_part = pl.pallas_call(
        kernel,
        out_shape=(jax.ShapeDtypeStruct((n_split, 1, 1), jnp.float32),
                   jax.ShapeDtypeStruct((n_split, 1, 1), jnp.float32)),
        grid=(n_split, tiles_per_split),
        in_specs=[
            pl.BlockSpec(memory_space=pltpu.SMEM),          # func_label (1,1) i32
            pl.BlockSpec((tile_n, c), tile_map),            # node_logits tiles
            pl.BlockSpec((tile_n, 1), tile_map),            # node_labels tiles
            pl.BlockSpec((1, c), lambda p, i: (0, 0)),      # graph_logits (resident)
        ],
        out_specs=(pl.BlockSpec((1, 1, 1), lambda p, i: (p, 0, 0)),
                   pl.BlockSpec((1, 1, 1), lambda p, i: (p, 0, 0))),
        scratch_shapes=[pltpu.VMEM((1, 1), jnp.float32)],
        compiler_params=pltpu.CompilerParams(
            dimension_semantics=("parallel", "arbitrary"),
            vmem_limit_bytes=(vmem_cap * 3) // 4),
    )(flabel2, node_logits, labels2, graph_logits2)

    # Cross-split reduction + 1/N + alpha combine: a few scalar ops in the
    # wrapper (required anyway once the node sum is split across TensorCores).
    alpha_f = jnp.asarray(alpha, jnp.float32)
    node_loss = jnp.sum(node_part[:, 0, 0]) * (1.0 / n)
    func_loss = func_part[0, 0, 0]
    return alpha_f * node_loss + (1.0 - alpha_f) * func_loss


def _reference(alpha, node_logits, node_labels, graph_logits, func_label):
    def ce(logits, labels):
        lse = jax.nn.logsumexp(logits.astype(jnp.float32), axis=-1)
        picked = jnp.take_along_axis(logits.astype(jnp.float32),
                                     labels[:, None], axis=-1)[:, 0]
        return jnp.mean(lse - picked)
    node_loss = ce(node_logits, node_labels)
    func_loss = ce(graph_logits.reshape(1, -1), jnp.asarray(func_label).reshape(1))
    return alpha * node_loss + (1.0 - alpha) * func_loss


if __name__ == "__main__":
    key = jax.random.PRNGKey(0)
    k1, k2, k3, k4 = jax.random.split(key, 4)

    # Small shapes consistent with the module: N graph nodes, C classes.
    N, C = 100, 16
    node_logits = jax.random.normal(k1, (N, C), dtype=jnp.float32)
    node_labels = jax.random.randint(k2, (N,), 0, C, dtype=jnp.int32)
    graph_logits = jax.random.normal(k3, (C,), dtype=jnp.float32)
    func_label = jax.random.randint(k4, (), 0, C, dtype=jnp.int32)

    # nn.Parameter(torch.tensor(0.5)) init.
    alpha = jnp.float32(0.5)

    ref = _reference(alpha, node_logits, node_labels, graph_logits, func_label)

    # Path 1: explicit small tile -> 3 real tiles on a 2-way split grid,
    # exercising the partial last tile AND the clamped/fully-masked extra tile.
    loss1 = learnable_weighted_loss(alpha, node_logits, node_labels,
                                    graph_logits, func_label, tile_n=48)
    jax.block_until_ready(loss1)
    assert jnp.allclose(loss1, ref, atol=1e-5, rtol=1e-5), (loss1, ref)

    # Path 2: auto tile size (production path; VMEM-budgeted MiB-scale tiles,
    # clamped to N here since the toy input is tiny).
    loss2 = learnable_weighted_loss(alpha, node_logits, node_labels,
                                    graph_logits, func_label)
    jax.block_until_ready(loss2)
    assert jnp.allclose(loss2, ref, atol=1e-5, rtol=1e-5), (loss2, ref)

    print("KERNEL_OK")
</pallas_src>

<mosaic_0001>
module attributes {stable_mosaic.version = 11 : i64} {
  func.func @_weighted_ce_kernel(%arg0: i32, %arg1: i32, %arg2: memref<1x1xi32, #tpu.memory_space<smem>>, %arg3: memref<48x16xf32, #tpu.memory_space<vmem>>, %arg4: memref<48x1xi32, #tpu.memory_space<vmem>>, %arg5: memref<1x16xf32, #tpu.memory_space<vmem>>, %arg6: memref<1x1x1xf32, #tpu.memory_space<vmem>>, %arg7: memref<1x1x1xf32, #tpu.memory_space<vmem>>, %arg8: memref<1x1xf32, #tpu.memory_space<vmem>>) attributes {dimension_semantics = [#tpu.dimension_semantics<parallel>, #tpu.dimension_semantics<arbitrary>], iteration_bounds = array<i64: 2, 2>, scalar_prefetch = 0 : i64, scratch_operands = 1 : i64, tpu.core_type = #tpu.core_type<tc>, window_params = [{transform_indices = @transform_0, window_bounds = array<i64: 1, 1>}, {transform_indices = @transform_1, window_bounds = array<i64: 48, 16>}, {transform_indices = @transform_2, window_bounds = array<i64: 48, 1>}, {pipeline_mode = #tpu.pipeline_mode<synchronous>, transform_indices = @transform_3, window_bounds = array<i64: 1, 16>}, {transform_indices = @transform_4, window_bounds = array<i64: 1, 1, 1>}, {transform_indices = @transform_5, window_bounds = array<i64: 1, 1, 1>}]} {
    %c0_i32 = arith.constant 0 : i32
    %0 = arith.cmpi eq, %arg1, %c0_i32 : i32
    %1 = arith.extui %0 : i1 to i32
    %c0_i32_0 = arith.constant 0 : i32
    %2 = arith.cmpi ne, %1, %c0_i32_0 : i32
    scf.if %2 {
      %cst_14 = arith.constant 0.000000e+00 : f32
      %40 = vector.broadcast %cst_14 : f32 to vector<1x1xf32>
      %c0_15 = arith.constant 0 : index
      %c0_16 = arith.constant 0 : index
      %41 = vector.load %arg8[%c0_15, %c0_16] : memref<1x1xf32, #tpu.memory_space<vmem>>, vector<1x1xf32>
      tpu.vector_store %arg8[%c0_15, %c0_16], %40 {strides = array<i32>} : memref<1x1xf32, #tpu.memory_space<vmem>>, vector<1x1xf32>,
    } else {
    }
    %c0 = arith.constant 0 : index
    %c0_1 = arith.constant 0 : index
    %3 = vector.load %arg3[%c0, %c0_1] : memref<48x16xf32, #tpu.memory_space<vmem>>, vector<48x16xf32>
    %c0_2 = arith.constant 0 : index
    %c0_3 = arith.constant 0 : index
    %4 = vector.load %arg4[%c0_2, %c0_3] : memref<48x1xi32, #tpu.memory_space<vmem>>, vector<48x1xi32>
    %cst = arith.constant dense<0xFF800000> : vector<48xf32>
    %5 = vector.multi_reduction <maximumf>, %3, %cst [1] : vector<48x16xf32> to vector<48xf32>
    %6 = vector.shape_cast %5 : vector<48xf32> to vector<48x1xf32>
    %7 = vector.broadcast %6 : vector<48x1xf32> to vector<48x16xf32>
    %8 = arith.subf %3, %7 : vector<48x16xf32>
    %9 = math.exp %8 : vector<48x16xf32>
    %cst_4 = arith.constant dense<0.000000e+00> : vector<48xf32>
    %10 = vector.multi_reduction <add>, %9, %cst_4 [1] : vector<48x16xf32> to vector<48xf32>
    %11 = vector.shape_cast %10 : vector<48xf32> to vector<48x1xf32>
    %12 = math.log %11 : vector<48x1xf32>
    %13 = arith.addf %12, %6 : vector<48x1xf32>
    %14 = tpu.iota {dimensions = array<i32: 1>} : vector<48x16xi32>
    %15 = vector.broadcast %4 : vector<48x1xi32> to vector<48x16xi32>
    %16 = arith.cmpi eq, %14, %15 : vector<48x16xi32>
    %cst_5 = arith.constant 0.000000e+00 : f32
    %17 = vector.broadcast %cst_5 : f32 to vector<48x16xf32>
    %18 = arith.select %16, %3, %17 : vector<48x16xi1>, vector<48x16xf32>
    %cst_6 = arith.constant dense<0.000000e+00> : vector<48xf32>
    %19 = vector.multi_reduction <add>, %18, %cst_6 [1] : vector<48x16xf32> to vector<48xf32>
    %20 = vector.shape_cast %19 : vector<48xf32> to vector<48x1xf32>
    %21 = arith.subf %13, %20 : vector<48x1xf32>
    %c2_i32 = arith.constant 2 : i32
    %22 = arith.muli %arg0, %c2_i32 : i32
    %23 = arith.addi %22, %arg1 : i32
    %c48_i32 = arith.constant 48 : i32
    %24 = arith.muli %23, %c48_i32 : i32
    %25 = tpu.iota {dimensions = array<i32: 0>} : vector<48x1xi32>
    %26 = vector.broadcast %24 : i32 to vector<48x1xi32>
    %27 = arith.addi %26, %25 : vector<48x1xi32>
    %c100_i32 = arith.constant 100 : i32
    %28 = vector.broadcast %c100_i32 : i32 to vector<48x1xi32>
    %29 = arith.cmpi slt, %27, %28 : vector<48x1xi32>
    %cst_7 = arith.constant 0.000000e+00 : f32
    %30 = vector.broadcast %cst_7 : f32 to vector<48x1xf32>
    %31 = arith.select %29, %21, %30 : vector<48x1xi1>, vector<48x1xf32>
    %c0_8 = arith.constant 0 : index
    %c0_9 = arith.constant 0 : index
    %32 = vector.load %arg8[%c0_8, %c0_9] : memref<1x1xf32, #tpu.memory_space<vmem>>, vector<1x1xf32>
    %cst_10 = arith.constant dense<0.000000e+00> : vector<1xf32>
    %33 = vector.multi_reduction <add>, %31, %cst_10 [0] : vector<48x1xf32> to vector<1xf32>
    %34 = vector.shape_cast %33 : vector<1xf32> to vector<1x1xf32>
    %35 = arith.addf %32, %34 : vector<1x1xf32>
    %c0_11 = arith.constant 0 : index
    %c0_12 = arith.constant 0 : index
    %36 = vector.load %arg8[%c0_11, %c0_12] : memref<1x1xf32, #tpu.memory_space<vmem>>, vector<1x1xf32>
    tpu.vector_store %arg8[%c0_11, %c0_12], %35 {strides = array<i32>} : memref<1x1xf32, #tpu.memory_space<vmem>>, vector<1x1xf32>,
    %c1_i32 = arith.constant 1 : i32
    %37 = arith.cmpi eq, %arg1, %c1_i32 : i32
    %38 = arith.extui %37 : i1 to i32
    %c0_i32_13 = arith.constant 0 : i32
    %39 = arith.cmpi ne, %38, %c0_i32_13 : i32
    scf.if %39 {
      %c0_14 = arith.constant 0 : index
      %c0_15 = arith.constant 0 : index
      %40 = vector.load %arg5[%c0_14, %c0_15] : memref<1x16xf32, #tpu.memory_space<vmem>>, vector<1x16xf32>
      %cst_16 = arith.constant dense<0xFF800000> : vector<1xf32>
      %41 = vector.multi_reduction <maximumf>, %40, %cst_16 [1] : vector<1x16xf32> to vector<1xf32>
      %42 = vector.shape_cast %41 : vector<1xf32> to vector<1x1xf32>
      %43 = vector.broadcast %42 : vector<1x1xf32> to vector<1x16xf32>
      %44 = arith.subf %40, %43 : vector<1x16xf32>
      %45 = math.exp %44 : vector<1x16xf32>
      %cst_17 = arith.constant dense<0.000000e+00> : vector<1xf32>
      %46 = vector.multi_reduction <add>, %45, %cst_17 [1] : vector<1x16xf32> to vector<1xf32>
      %47 = vector.shape_cast %46 : vector<1xf32> to vector<1x1xf32>
      %48 = math.log %47 : vector<1x1xf32>
      %49 = arith.addf %48, %42 : vector<1x1xf32>
      %50 = tpu.iota {dimensions = array<i32: 1>} : vector<1x16xi32>
      %c0_18 = arith.constant 0 : index
      %c0_19 = arith.constant 0 : index
      %51 = memref.load %arg2[%c0_18, %c0_19] : memref<1x1xi32, #tpu.memory_space<smem>>
      %52 = vector.broadcast %51 : i32 to vector<1x16xi32>
      %53 = arith.cmpi eq, %50, %52 : vector<1x16xi32>
      %cst_20 = arith.constant 0.000000e+00 : f32
      %54 = vector.broadcast %cst_20 : f32 to vector<1x16xf32>
      %55 = arith.select %53, %40, %54 : vector<1x16xi1>, vector<1x16xf32>
      %cst_21 = arith.constant dense<0.000000e+00> : vector<1xf32>
      %56 = vector.multi_reduction <add>, %55, %cst_21 [1] : vector<1x16xf32> to vector<1xf32>
      %57 = vector.shape_cast %56 : vector<1xf32> to vector<1x1xf32>
      %c0_22 = arith.constant 0 : index
      %c0_23 = arith.constant 0 : index
      %58 = vector.load %arg8[%c0_22, %c0_23] : memref<1x1xf32, #tpu.memory_space<vmem>>, vector<1x1xf32>
      %59 = vector.shape_cast %58 : vector<1x1xf32> to vector<1x1x1xf32>
      %c0_24 = arith.constant 0 : index
      %c0_25 = arith.constant 0 : index
      %c0_26 = arith.constant 0 : index
      %60 = vector.load %arg6[%c0_24, %c0_25, %c0_26] : memref<1x1x1xf32, #tpu.memory_space<vmem>>, vector<1x1x1xf32>
      tpu.vector_store %arg6[%c0_24, %c0_25, %c0_26], %59 {strides = array<i32>} : memref<1x1x1xf32, #tpu.memory_space<vmem>>, vector<1x1x1xf32>,
      %61 = arith.subf %49, %57 : vector<1x1xf32>
      %62 = vector.shape_cast %61 : vector<1x1xf32> to vector<1x1x1xf32>
      %c0_27 = arith.constant 0 : index
      %c0_28 = arith.constant 0 : index
      %c0_29 = arith.constant 0 : index
      %63 = vector.load %arg7[%c0_27, %c0_28, %c0_29] : memref<1x1x1xf32, #tpu.memory_space<vmem>>, vector<1x1x1xf32>
      tpu.vector_store %arg7[%c0_27, %c0_28, %c0_29], %62 {strides = array<i32>} : memref<1x1x1xf32, #tpu.memory_space<vmem>>, vector<1x1x1xf32>,
    } else {
    }
    return
  }
  func.func @transform_0(%arg0: i32, %arg1: i32) -> (i32, i32) {
    %c0_i32 = arith.constant 0 : i32
    %c0_i32_0 = arith.constant 0 : i32
    %c0_i32_1 = arith.constant 0 : i32
    return %c0_i32, %c0_i32_0 : i32, i32
  }
  func.func @transform_1(%arg0: i32, %arg1: i32) -> (i32, i32) {
    %c2_i32 = arith.constant 2 : i32
    %0 = arith.muli %arg0, %c2_i32 : i32
    %1 = arith.addi %0, %arg1 : i32
    %c2_i32_0 = arith.constant 2 : i32
    %2 = arith.minsi %1, %c2_i32_0 : i32
    %c0_i32 = arith.constant 0 : i32
    %c0_i32_1 = arith.constant 0 : i32
    return %2, %c0_i32 : i32, i32
  }
  func.func @transform_2(%arg0: i32, %arg1: i32) -> (i32, i32) {
    %c2_i32 = arith.constant 2 : i32
    %0 = arith.muli %arg0, %c2_i32 : i32
    %1 = arith.addi %0, %arg1 : i32
    %c2_i32_0 = arith.constant 2 : i32
    %2 = arith.minsi %1, %c2_i32_0 : i32
    %c0_i32 = arith.constant 0 : i32
    %c0_i32_1 = arith.constant 0 : i32
    return %2, %c0_i32 : i32, i32
  }
  func.func @transform_3(%arg0: i32, %arg1: i32) -> (i32, i32) {
    %c0_i32 = arith.constant 0 : i32
    %c0_i32_0 = arith.constant 0 : i32
    %c0_i32_1 = arith.constant 0 : i32
    return %c0_i32, %c0_i32_0 : i32, i32
  }
  func.func @transform_4(%arg0: i32, %arg1: i32) -> (i32, i32, i32) {
    %c0_i32 = arith.constant 0 : i32
    %c0_i32_0 = arith.constant 0 : i32
    %c0_i32_1 = arith.constant 0 : i32
    return %arg0, %c0_i32, %c0_i32_0 : i32, i32, i32
  }
  func.func @transform_5(%arg0: i32, %arg1: i32) -> (i32, i32, i32) {
    %c0_i32 = arith.constant 0 : i32
    %c0_i32_0 = arith.constant 0 : i32
    %c0_i32_1 = arith.constant 0 : i32
    return %arg0, %c0_i32, %c0_i32_0 : i32, i32, i32
  }
}

</mosaic_0001>

<llo_original>
// kernel: tpu_custom_call.1
$region0: #{tpu_custom_call.1}
  #allocation0 [shape = 'u32[]', space=smem, size = 0x4, offset = 0x4, fixed_abs, tag = 'smem constant byte address 0x4 - core index']
  #allocation1 [shape = 'u32[144,128]{1,0:T(1,128)}', space=vmem, size = 0x12000, scoped, tag = 'internal scratch']
  #allocation2 [shape = 'f32[1,1]{1,0:T(1,128)}', space=vmem, size = 0x200, scoped, tag = 'scratch operand']
  #allocation3 [shape = 's32[1,1]{1,0:T(1,128)S(6)}', space=smem, size = 0x200, scoped, tag = 'scoped memory for tpu_custom_call.1']
  %s0 = inlined_call_operand.<no memory space> [shape: s32[1,1], index: 0, kind: input, shape index: {}]
  %s1 = inlined_call_operand.vmem [shape: f32[100,16], index: 1, kind: input, shape index: {}]
  %s2 = inlined_call_operand.vmem [shape: s32[100,1], index: 2, kind: input, shape index: {}]
  %s3 = inlined_call_operand.vmem [shape: f32[1,16], index: 3, kind: input, shape index: {}]
  %s4 = inlined_call_operand.vmem [shape: f32[2,1,1], index: 4, kind: output, shape index: {0}]
  %s5 = inlined_call_operand.vmem [shape: f32[2,1,1], index: 5, kind: output, shape index: {1}]
  %6 = xla_tuple %s4, %s5
  %s7 = sld [smem:[#allocation0]]
  $region65: #{tpu_custom_call.1} parent=0
    _
  %s9 = ssub.s32 1, %s7
  %s10 = scalar_select 0, %s9, %s7
  %11 = sst [smem:[#allocation3]] %s0
  loop: start=0, step=1, limit=6
  $region2: #{tpu_custom_call.1} parent=0 // loop_pre_header
    _
  $region3: #{tpu_custom_call.1} parent=0 // loop_header
    %s13 = sphi 0, %s17
    %p14 = scmp.ge.s32.totalorder %s13, 6
    %s20 = sphi 0, %s32
    %s21 = sphi 0, %s28
    %s22 = sphi 0, %s20
    %s23 = sphi 0, %s21
    %s24 = sphi 0, %s22
    %s25 = sphi 0, %s23
    %s33 = sphi 0, %s33
    %s35 = sphi 0, %s33
    %s36 = sphi 0, %s35
    %s50 = sphi 0, %s36
    %s64 = sphi 0, %s66
    %s67 = sphi 0, %s64
    %s68 = sphi 0, %s67
    %s84 = sphi 0, %s68
    %s98 = sphi 0, %s100
    %s101 = sphi 0, %s98
    %s102 = sphi 0, %s101
    %s118 = sphi 0, %s102
    %s122 = sphi 0, %s122
    %s124 = sphi 0, %s122
    %s125 = sphi 0, %s124
    %s139 = sphi 0, %s125
    %s145 = sphi 0, %s147
    %s148 = sphi 0, %s145
    %s149 = sphi 0, %s148
    %s165 = sphi 0, %s149
    %s171 = sphi 0, %s173
    %s174 = sphi 0, %s171
    %s175 = sphi 0, %s174
    %s191 = sphi 0, %s175
  $region4: #{tpu_custom_call.1} parent=0 // loop_header_branch
    %16 = sbr.rel (%p14) target = $region8
  $region5: #{tpu_custom_call.1} parent=0 // loop_body
    %s18 = ssub.s32 %s13, 1
    %s19 = ssub.s32 %s13, 2
    %s26 = sadd.s32 1, %s21
    %p27 = scmp.ge.s32.totalorder %s26, 2
    %s28 = scalar_select %p27, 0, %s26
    %s29 = sadd.s32 1, %s20
    %s30 = scalar_select %p27, %s29, %s20
    %p31 = scmp.ge.s32.totalorder %s30, 2
    %s32 = scalar_select %p31, 0, %s30
    %s34 = sadd.s32 %s33, 1
    %p37 = scmp.eq.s32.totalorder %s13, 3
    %p38 = scmp.ne.s32.totalorder %s33, %s35
    %p39 = scmp.eq.s32.totalorder %s13, 0
    %p40 = por %p38, %p39
    %p41 = scmp.ne.s32.totalorder %s33, %s35
    %p42 = scmp.eq.s32.totalorder %s18, 3
    %p43 = por %p41, %p42
    %p44 = scmp.ne.s32.totalorder %s35, %s36
    %p45 = scmp.eq.s32.totalorder %s18, 0
    %p46 = por %p44, %p45
    %p47 = scmp.ne.s32.totalorder %s35, %s36
    %p48 = scmp.eq.s32.totalorder %s19, 3
    %p49 = por %p47, %p48
    %p51 = scmp.ne.s32.totalorder %s36, %s50
    %p52 = scmp.eq.s32.totalorder %s19, 0
    %p53 = por %p51, %p52
    %s54 = smul.u32 %s20, 2
    %s55 = sadd.s32 %s54, %s21
    %p56 = scmp.lt.s32.totalorder %s55, 2
    %s57 = scalar_select %p56, %s55, 2
    %s58 = smul.u32 %s32, 2
    %s59 = sadd.s32 %s58, %s28
    %p60 = scmp.lt.s32.totalorder %s59, 2
    %s61 = scalar_select %p60, %s59, 2
    %s62 = ssub.s32 %s57, %s61
    %p63 = scmp.eq.s32.totalorder %s62, 0
    %s65 = sadd.s32 %s64, 1
    %s66 = scalar_select %p63, %s64, %s65
    %p69 = pneg %p63
    %p70 = scmp.eq.s32.totalorder %s13, 3
    %p71 = por %p69, %p70
    %p72 = scmp.ne.s32.totalorder %s64, %s67
    %p73 = scmp.eq.s32.totalorder %s13, 0
    %p74 = por %p72, %p73
    %p75 = scmp.ne.s32.totalorder %s64, %s67
    %p76 = scmp.eq.s32.totalorder %s18, 3
    %p77 = por %p75, %p76
    %p78 = scmp.ne.s32.totalorder %s67, %s68
    %p79 = scmp.eq.s32.totalorder %s18, 0
    %p80 = por %p78, %p79
    %p81 = scmp.ne.s32.totalorder %s67, %s68
    %p82 = scmp.eq.s32.totalorder %s19, 3
    %p83 = por %p81, %p82
    %p85 = scmp.ne.s32.totalorder %s68, %s84
    %p86 = scmp.eq.s32.totalorder %s19, 0
    %p87 = por %p85, %p86
    %s88 = smul.u32 %s20, 2
    %s89 = sadd.s32 %s88, %s21
    %p90 = scmp.lt.s32.totalorder %s89, 2
    %s91 = scalar_select %p90, %s89, 2
    %s92 = smul.u32 %s32, 2
    %s93 = sadd.s32 %s92, %s28
    %p94 = scmp.lt.s32.totalorder %s93, 2
    %s95 = scalar_select %p94, %s93, 2
    %s96 = ssub.s32 %s91, %s95
    %p97 = scmp.eq.s32.totalorder %s96, 0
    %s99 = sadd.s32 %s98, 1
    %s100 = scalar_select %p97, %s98, %s99
    %p103 = pneg %p97
    %p104 = scmp.eq.s32.totalorder %s13, 3
    %p105 = por %p103, %p104
    %p106 = scmp.ne.s32.totalorder %s98, %s101
    %p107 = scmp.eq.s32.totalorder %s13, 0
    %p108 = por %p106, %p107
    %p109 = scmp.ne.s32.totalorder %s98, %s101
    %p110 = scmp.eq.s32.totalorder %s18, 3
    %p111 = por %p109, %p110
    %p112 = scmp.ne.s32.totalorder %s101, %s102
    %p113 = scmp.eq.s32.totalorder %s18, 0
    %p114 = por %p112, %p113
    %p115 = scmp.ne.s32.totalorder %s101, %s102
    %p116 = scmp.eq.s32.totalorder %s19, 3
    %p117 = por %p115, %p116
    %p119 = scmp.ne.s32.totalorder %s102, %s118
    %p120 = scmp.eq.s32.totalorder %s19, 0
    %p121 = por %p119, %p120
    %s123 = sadd.s32 %s122, 1
    %p126 = scmp.eq.s32.totalorder %s13, 3
    %p127 = scmp.ne.s32.totalorder %s122, %s124
    %p128 = scmp.eq.s32.totalorder %s13, 0
    %p129 = por %p127, %p128
    %p130 = scmp.ne.s32.totalorder %s122, %s124
    %p131 = scmp.eq.s32.totalorder %s18, 3
    %p132 = por %p130, %p131
    %p133 = scmp.ne.s32.totalorder %s124, %s125
    %p134 = scmp.eq.s32.totalorder %s18, 0
    %p135 = por %p133, %p134
    %p136 = scmp.ne.s32.totalorder %s124, %s125
    %p137 = scmp.eq.s32.totalorder %s19, 3
    %p138 = por %p136, %p137
    %p140 = scmp.ne.s32.totalorder %s125, %s139
    %p141 = scmp.eq.s32.totalorder %s19, 0
    %p142 = por %p140, %p141
    %s143 = ssub.s32 %s20, %s32
    %p144 = scmp.eq.s32.totalorder %s143, 0
    %s146 = sadd.s32 %s145, 1
    %s147 = scalar_select %p144, %s145, %s146
    %p150 = pneg %p144
    %p151 = scmp.eq.s32.totalorder %s13, 3
    %p152 = por %p150, %p151
    %p153 = scmp.ne.s32.totalorder %s145, %s148
    %p154 = scmp.eq.s32.totalorder %s13, 0
    %p155 = por %p153, %p154
    %p156 = scmp.ne.s32.totalorder %s145, %s148
    %p157 = scmp.eq.s32.totalorder %s18, 3
    %p158 = por %p156, %p157
    %p159 = scmp.ne.s32.totalorder %s148, %s149
    %p160 = scmp.eq.s32.totalorder %s18, 0
    %p161 = por %p159, %p160
    %p162 = scmp.ne.s32.totalorder %s148, %s149
    %p163 = scmp.eq.s32.totalorder %s19, 3
    %p164 = por %p162, %p163
    %p166 = scmp.ne.s32.totalorder %s149, %s165
    %p167 = scmp.eq.s32.totalorder %s19, 0
    %p168 = por %p166, %p167
    %s169 = ssub.s32 %s20, %s32
    %p170 = scmp.eq.s32.totalorder %s169, 0
    %s172 = sadd.s32 %s171, 1
    %s173 = scalar_select %p170, %s171, %s172
    %p176 = pneg %p170
    %p177 = scmp.eq.s32.totalorder %s13, 3
    %p178 = por %p176, %p177
    %p179 = scmp.ne.s32.totalorder %s171, %s174
    %p180 = scmp.eq.s32.totalorder %s13, 0
    %p181 = por %p179, %p180
    %p182 = scmp.ne.s32.totalorder %s171, %s174
    %p183 = scmp.eq.s32.totalorder %s18, 3
    %p184 = por %p182, %p183
    %p185 = scmp.ne.s32.totalorder %s174, %s175
    %p186 = scmp.eq.s32.totalorder %s18, 0
    %p187 = por %p185, %p186
    %p188 = scmp.ne.s32.totalorder %s174, %s175
    %p189 = scmp.eq.s32.totalorder %s19, 3
    %p190 = por %p188, %p189
    %p192 = scmp.ne.s32.totalorder %s175, %s191
    %p193 = scmp.eq.s32.totalorder %s19, 0
    %p194 = por %p192, %p193
    %p195 = scmp.le.s32.totalorder 1, %s13
    %p196 = scmp.lt.s32.totalorder %s13, 5
    %p197 = pnand %p195, %p196
    %p198 = pneg %p197
    // Predicated region
    $region9: #{tpu_custom_call.1} parent=5 // pred_check
      _
    $region10: #{tpu_custom_call.1} parent=5 // pred_check_branch
      %200 = sbr.rel (%p197) target = $region12
    $region11: #{tpu_custom_call.1} parent=5 // pred_region
      %s201 = ssub.s32 %s13, 1
      // Predicated region
      $region13: #{tpu_custom_call.1} parent=11 // pred_check
        %p202 = pneg %p46
      $region14: #{tpu_custom_call.1} parent=11 // pred_check_branch
        %204 = sbr.rel (%p202) target = $region16
      $region15: #{tpu_custom_call.1} parent=11 // pred_region
        _
      $region16: #{tpu_custom_call.1} parent=11 // pred_fallthru
        _
      // Predicated region
      $region17: #{tpu_custom_call.1} parent=11 // pred_check
        %p205 = pneg %p135
      $region18: #{tpu_custom_call.1} parent=11 // pred_check_branch
        %207 = sbr.rel (%p205) target = $region20
      $region19: #{tpu_custom_call.1} parent=11 // pred_region
        _
      $region20: #{tpu_custom_call.1} parent=11 // pred_fallthru
        _
    $region12: #{tpu_custom_call.1} parent=5 // pred_fallthru
      _
    %p208 = scmp.lt.s32.totalorder %s13, 4
    // Predicated region
    $region21: #{tpu_custom_call.1} parent=5 // pred_check
      %p209 = pneg %p208
    $region22: #{tpu_custom_call.1} parent=5 // pred_check_branch
      %211 = sbr.rel (%p209) target = $region24
    $region23: #{tpu_custom_call.1} parent=5 // pred_region
      // Predicated region
      $region25: #{tpu_custom_call.1} parent=23 // pred_check
        %p212 = pneg %p74
      $region26: #{tpu_custom_call.1} parent=23 // pred_check_branch
        %214 = sbr.rel (%p212) target = $region28
      $region27: #{tpu_custom_call.1} parent=23 // pred_region
        %s215 = smul.u32 %s20, 2
        %s216 = sadd.s32 %s215, %s21
        %p217 = scmp.lt.s32.totalorder %s216, 2
        %s218 = scalar_select %p217, %s216, 2
        %s219 = smul.u32 6, %s218
        %s220 = ssub.s32 13, %s219
        %p221 = scmp.lt.s32.totalorder %s220, 6
        %s222 = scalar_select %p221, %s220, 6
        %s223 = smul.u32 128, %s222
        %p224 = scmp.lt.s32.totalorder %s219, 12
        %s225 = scalar_select %p224, %s219, 12
        %s226 = smul.addr %s225, 8
        %s227 = scalar_lea.vmem %s1, %s226
        %s228 = smul.u32 %s20, 2
        %s229 = sadd.s32 %s228, %s21
        %p230 = scmp.lt.s32.totalorder %s229, 2
        %s231 = scalar_select %p230, %s229, 2
        %s232 = smul.u32 6, %s231
        %s233 = ssub.s32 13, %s232
        %p234 = scmp.lt.s32.totalorder %s233, 6
        %s235 = scalar_select %p234, %s233, 6
        %s236 = smul.u32 128, %s235
      $region28: #{tpu_custom_call.1} parent=23 // pred_fallthru
        _
      // Predicated region
      $region29: #{tpu_custom_call.1} parent=23 // pred_check
        %p237 = pneg %p108
      $region30: #{tpu_custom_call.1} parent=23 // pred_check_branch
        %239 = sbr.rel (%p237) target = $region32
      $region31: #{tpu_custom_call.1} parent=23 // pred_region
        %s240 = smul.u32 %s20, 2
        %s241 = sadd.s32 %s240, %s21
        %p242 = scmp.lt.s32.totalorder %s241, 2
        %s243 = scalar_select %p242, %s241, 2
        %s244 = smul.u32 6, %s243
        %s245 = ssub.s32 13, %s244
        %p246 = scmp.lt.s32.totalorder %s245, 6
        %s247 = scalar_select %p246, %s245, 6
        %s248 = smul.u32 128, %s247
        %p249 = scmp.lt.s32.totalorder %s244, 12
        %s250 = scalar_select %p249, %s244, 12
        %s251 = smul.addr %s250, 8
        %s252 = scalar_lea.vmem %s2, %s251
        %s253 = smul.u32 %s20, 2
        %s254 = sadd.s32 %s253, %s21
        %p255 = scmp.lt.s32.totalorder %s254, 2
        %s256 = scalar_select %p255, %s254, 2
        %s257 = smul.u32 6, %s256
        %s258 = ssub.s32 13, %s257
        %p259 = scmp.lt.s32.totalorder %s258, 6
        %s260 = scalar_select %p259, %s258, 6
        %s261 = smul.u32 128, %s260
      $region32: #{tpu_custom_call.1} parent=23 // pred_fallthru
        _
    $region24: #{tpu_custom_call.1} parent=5 // pred_fallthru
      _
    %p262 = scmp.le.s32.totalorder 1, %s13
    %p263 = scmp.lt.s32.totalorder %s13, 5
    %p264 = pnand %p262, %p263
    %p265 = pneg %p264
    // Predicated region
    $region33: #{tpu_custom_call.1} parent=5 // pred_check
      _
    $region34: #{tpu_custom_call.1} parent=5 // pred_check_branch
      %267 = sbr.rel (%p264) target = $region36
    $region35: #{tpu_custom_call.1} parent=5 // pred_region
      %s268 = ssub.s32 %s13, 1
      %p269 = pneg %p46
      %p270 = pneg %p43
      %s271 = smul.u32 %s22, 2
      %s272 = sadd.s32 %s271, %s23
      %p273 = scmp.lt.s32.totalorder %s272, 2
      %s274 = scalar_select %p273, %s272, 2
      %s275 = smul.u32 6, %s274
      %s276 = ssub.s32 13, %s275
      %p277 = scmp.lt.s32.totalorder %s276, 6
      %s278 = scalar_select %p277, %s276, 6
      %s279 = smul.u32 128, %s278
      %p280 = scmp.lt.s32.totalorder %s275, 12
      %s281 = scalar_select %p280, %s275, 12
      %s282 = smul.addr %s281, 8
      %s283 = scalar_lea.vmem %s1, %s282
      %p284 = pneg %p80
      %p285 = pneg %p77
      %s286 = smul.u32 %s22, 2
      %s287 = sadd.s32 %s286, %s23
      %p288 = scmp.lt.s32.totalorder %s287, 2
      %s289 = scalar_select %p288, %s287, 2
      %s290 = smul.u32 6, %s289
      %s291 = ssub.s32 13, %s290
      %p292 = scmp.lt.s32.totalorder %s291, 6
      %s293 = scalar_select %p292, %s291, 6
      %s294 = smul.u32 128, %s293
      %p295 = scmp.lt.s32.totalorder %s290, 12
      %s296 = scalar_select %p295, %s290, 12
      %s297 = smul.addr %s296, 8
      %s298 = scalar_lea.vmem %s2, %s297
      %p299 = pneg %p114
      %p300 = pneg %p111
      %p301 = pneg %p135
      %p302 = pneg %p132
      %p303 = pneg %p161
      %p304 = pneg %p158
      %p305 = scmp.lt.s32.totalorder %s22, 1
      %s306 = scalar_select %p305, %s22, 1
      %s307 = scalar_lea.vmem %s4, %s306
      %p308 = pneg %p187
      %p309 = pneg %p184
      %p310 = scmp.lt.s32.totalorder %s22, 1
      %s311 = scalar_select %p310, %s22, 1
      %s312 = scalar_lea.vmem %s5, %s311
      %s313 = smul.u32 %s22, 2
      %s314 = sadd.s32 %s313, %s23
      %p315 = scmp.lt.s32.totalorder %s314, 2
      %s316 = scalar_select %p315, %s314, 2
      %s317 = smul.u32 6, %s316
      %s318 = ssub.s32 13, %s317
      %p319 = scmp.lt.s32.totalorder %s318, 6
      %s320 = scalar_select %p319, %s318, 6
      %s321 = smul.u32 128, %s320
      %p322 = scmp.lt.s32.totalorder %s317, 12
      %s323 = scalar_select %p322, %s317, 12
      %s324 = smul.addr %s323, 8
      %s325 = scalar_lea.vmem %s1, %s324
      %s326 = smul.u32 %s22, 2
      %s327 = sadd.s32 %s326, %s23
      %p328 = scmp.lt.s32.totalorder %s327, 2
      %s329 = scalar_select %p328, %s327, 2
      %s330 = smul.u32 6, %s329
      %s331 = ssub.s32 13, %s330
      %p332 = scmp.lt.s32.totalorder %s331, 6
      %s333 = scalar_select %p332, %s331, 6
      %s334 = smul.u32 128, %s333
      %s335 = smul.u32 %s22, 2
      %s336 = sadd.s32 %s335, %s23
      %p337 = scmp.lt.s32.totalorder %s336, 2
      %s338 = scalar_select %p337, %s336, 2
      %s339 = smul.u32 6, %s338
      %s340 = ssub.s32 13, %s339
      %p341 = scmp.lt.s32.totalorder %s340, 6
      %s342 = scalar_select %p341, %s340, 6
      %s343 = smul.u32 128, %s342
      %p344 = scmp.lt.s32.totalorder %s339, 12
      %s345 = scalar_select %p344, %s339, 12
      %s346 = smul.addr %s345, 8
      %s347 = scalar_lea.vmem %s2, %s346
      %s348 = smul.u32 %s22, 2
      %s349 = sadd.s32 %s348, %s23
      %p350 = scmp.lt.s32.totalorder %s349, 2
      %s351 = scalar_select %p350, %s349, 2
      %s352 = smul.u32 6, %s351
      %s353 = ssub.s32 13, %s352
      %p354 = scmp.lt.s32.totalorder %s353, 6
      %s355 = scalar_select %p354, %s353, 6
      %s356 = smul.u32 128, %s355
      %p357 = scmp.lt.s32.totalorder %s22, 1
      %s358 = scalar_select %p357, %s22, 1
      %s359 = scalar_lea.vmem %s4, %s358
      %p360 = scmp.lt.s32.totalorder %s22, 1
      %s361 = scalar_select %p360, %s22, 1
      %s362 = scalar_lea.vmem %s5, %s361
      %p363 = scmp.eq.s32.totalorder %s23, 0
      // Predicated region
      $region37: #{tpu_custom_call.1} parent=35 // pred_check
        %p364 = pneg %p363
      $region38: #{tpu_custom_call.1} parent=35 // pred_check_branch
        %366 = sbr.rel (%p364) target = $region40
      $region39: #{tpu_custom_call.1} parent=35 // pred_region
        %vm367 = vcmask 0
        %368 = vst.msk [vmem:[#allocation2] sm:$0x1] %vm367, 0.0
      $region40: #{tpu_custom_call.1} parent=35 // pred_fallthru
        _
      %v369 = vld [vmem:[%s325] sm:$0xff]
      %v370 = vld [vmem:[%s325 + $0x8] sm:$0xff]
      %v371 = vld [vmem:[%s325 + $0x10] sm:$0xff]
      %v372 = vld [vmem:[%s325 + $0x18] sm:$0xff]
      %v373 = vld [vmem:[%s325 + $0x20] sm:$0xff]
      %v374 = vld [vmem:[%s325 + $0x28] sm:$0xff]
      %v375 = vld [vmem:[%s347] sm:$0xff]
      %v376 = vld [vmem:[%s347 + $0x8] sm:$0xff]
      %v377 = vld [vmem:[%s347 + $0x10] sm:$0xff]
      %v378 = vld [vmem:[%s347 + $0x18] sm:$0xff]
      %v379 = vld [vmem:[%s347 + $0x20] sm:$0xff]
      %v380 = vld [vmem:[%s347 + $0x28] sm:$0xff]
      %vm381 = vcmask 130048
      %v382 = vsel %vm381, %v369, -inf
      %383 = vmax.xlane.f32.xlu0 %v382
      %v384 = vpop.xlane.xlu0 %383
      %v385 = vsel %vm381, %v370, -inf
      %386 = vmax.xlane.f32.xlu0 %v385
      %v387 = vpop.xlane.xlu0 %386
      %v388 = vsel %vm381, %v371, -inf
      %389 = vmax.xlane.f32.xlu0 %v388
      %v390 = vpop.xlane.xlu0 %389
      %v391 = vsel %vm381, %v372, -inf
      %392 = vmax.xlane.f32.xlu0 %v391
      %v393 = vpop.xlane.xlu0 %392
      %v394 = vsel %vm381, %v373, -inf
      %395 = vmax.xlane.f32.xlu0 %v394
      %v396 = vpop.xlane.xlu0 %395
      %v397 = vsel %vm381, %v374, -inf
      %398 = vmax.xlane.f32.xlu0 %v397
      %v399 = vpop.xlane.xlu0 %398
      %v400 = vsub.f32 %v369, %v384
      %v401 = vsub.f32 %v370, %v387
      %v402 = vsub.f32 %v371, %v390
      %v403 = vsub.f32 %v372, %v393
      %v404 = vsub.f32 %v373, %v396
      %v405 = vsub.f32 %v374, %v399
      %v406 = vmul.f32 %v400, 1.442695
      %v407 = vpow.pop %v406
      %v408 = vmul.f32 %v401, 1.442695
      %v409 = vpow.pop %v408
      %v410 = vmul.f32 %v402, 1.442695
      %v411 = vpow.pop %v410
      %v412 = vmul.f32 %v403, 1.442695
      %v413 = vpow.pop %v412
      %v414 = vmul.f32 %v404, 1.442695
      %v415 = vpow.pop %v414
      %v416 = vmul.f32 %v405, 1.442695
      %v417 = vpow.pop %v416
      %v418 = vsel %vm381, %v407, 0.0
      %419 = vadd.xlane.f32.xlu0 %v418
      %v420 = vpop.xlane.xlu0 %419
      %v421 = vsel %vm381, %v409, 0.0
      %422 = vadd.xlane.f32.xlu0 %v421
      %v423 = vpop.xlane.xlu0 %422
      %v424 = vsel %vm381, %v411, 0.0
      %425 = vadd.xlane.f32.xlu0 %v424
      %v426 = vpop.xlane.xlu0 %425
      %v427 = vsel %vm381, %v413, 0.0
      %428 = vadd.xlane.f32.xlu0 %v427
      %v429 = vpop.xlane.xlu0 %428
      %v430 = vsel %vm381, %v415, 0.0
      %431 = vadd.xlane.f32.xlu0 %v430
      %v432 = vpop.xlane.xlu0 %431
      %v433 = vsel %vm381, %v417, 0.0
      %434 = vadd.xlane.f32.xlu0 %v433
      %v435 = vpop.xlane.xlu0 %434
      %v436 = vlog2.pop %v420
      %v437 = vmul.f32 %v436, 0.6931472
      %v438 = vlog2.pop %v423
      %v439 = vmul.f32 %v438, 0.6931472
      %v440 = vlog2.pop %v426
      %v441 = vmul.f32 %v440, 0.6931472
      %v442 = vlog2.pop %v429
      %v443 = vmul.f32 %v442, 0.6931472
      %v444 = vlog2.pop %v432
      %v445 = vmul.f32 %v444, 0.6931472
      %v446 = vlog2.pop %v435
      %v447 = vmul.f32 %v446, 0.6931472
      %v448 = vadd.f32 %v437, %v384
      %v449 = vadd.f32 %v439, %v387
      %v450 = vadd.f32 %v441, %v390
      %v451 = vadd.f32 %v443, %v393
      %v452 = vadd.f32 %v445, %v396
      %v453 = vadd.f32 %v447, %v399
      %v454 = vlaneseq
      %v455 = vand.u32 %v454, 127
      %456 = vset.pattern.permute.xlu0 0
      %457 = vperm.xlu0 %456, %v375
      %v458 = vpop.permute.xlu0 %457
      %459 = vset.pattern.permute.xlu0 0
      %460 = vperm.xlu0 %459, %v376
      %v461 = vpop.permute.xlu0 %460
      %462 = vset.pattern.permute.xlu0 0
      %463 = vperm.xlu0 %462, %v377
      %v464 = vpop.permute.xlu0 %463
      %465 = vset.pattern.permute.xlu0 0
      %466 = vperm.xlu0 %465, %v378
      %v467 = vpop.permute.xlu0 %466
      %468 = vset.pattern.permute.xlu0 0
      %469 = vperm.xlu0 %468, %v379
      %v470 = vpop.permute.xlu0 %469
      %471 = vset.pattern.permute.xlu0 0
      %472 = vperm.xlu0 %471, %v380
      %v473 = vpop.permute.xlu0 %472
      %vm474 = vcmp.eq.s32.totalorder %v455, %v458
      %vm475 = vcmp.eq.s32.totalorder %v455, %v461
      %vm476 = vcmp.eq.s32.totalorder %v455, %v464
      %vm477 = vcmp.eq.s32.totalorder %v455, %v467
      %vm478 = vcmp.eq.s32.totalorder %v455, %v470
      %vm479 = vcmp.eq.s32.totalorder %v455, %v473
      %v480 = vsel %vm474, %v369, 0.0
      %v481 = vsel %vm475, %v370, 0.0
      %v482 = vsel %vm476, %v371, 0.0
      %v483 = vsel %vm477, %v372, 0.0
      %v484 = vsel %vm478, %v373, 0.0
      %v485 = vsel %vm479, %v374, 0.0
      %v486 = vsel %vm381, %v480, 0.0
      %487 = vadd.xlane.f32.xlu0 %v486
      %v488 = vpop.xlane.xlu0 %487
      %v489 = vsel %vm381, %v481, 0.0
      %490 = vadd.xlane.f32.xlu0 %v489
      %v491 = vpop.xlane.xlu0 %490
      %v492 = vsel %vm381, %v482, 0.0
      %493 = vadd.xlane.f32.xlu0 %v492
      %v494 = vpop.xlane.xlu0 %493
      %v495 = vsel %vm381, %v483, 0.0
      %496 = vadd.xlane.f32.xlu0 %v495
      %v497 = vpop.xlane.xlu0 %496
      %v498 = vsel %vm381, %v484, 0.0
      %499 = vadd.xlane.f32.xlu0 %v498
      %v500 = vpop.xlane.xlu0 %499
      %v501 = vsel %vm381, %v485, 0.0
      %502 = vadd.xlane.f32.xlu0 %v501
      %v503 = vpop.xlane.xlu0 %502
      %v504 = vsub.f32 %v448, %v488
      %v505 = vsub.f32 %v449, %v491
      %v506 = vsub.f32 %v450, %v494
      %v507 = vsub.f32 %v451, %v497
      %v508 = vsub.f32 %v452, %v500
      %v509 = vsub.f32 %v453, %v503
      %s510 = smul.u32 %s22, 2
      %s511 = sadd.s32 %s510, %s23
      %s512 = smul.u32 %s511, 48
      %v513 = vlaneseq
      %v514 = vshrl.u32 %v513, 7
      %v515 = vadd.s32 %v514, 8
      %v516 = vadd.s32 %v514, 16
      %v517 = vadd.s32 %v514, 24
      %v518 = vadd.s32 %v514, 32
      %v519 = vadd.s32 %v514, 40
      %v520 = vstv %s512
      %v521 = vadd.s32 %v520, %v514
      %v522 = vadd.s32 %v520, %v515
      %v523 = vadd.s32 %v520, %v516
      %v524 = vadd.s32 %v520, %v517
      %v525 = vadd.s32 %v520, %v518
      %v526 = vadd.s32 %v520, %v519
      %vm527 = vcmp.lt.s32.totalorder %v521, 100
      %vm528 = vcmp.lt.s32.totalorder %v522, 100
      %vm529 = vcmp.lt.s32.totalorder %v523, 100
      %vm530 = vcmp.lt.s32.totalorder %v524, 100
      %vm531 = vcmp.lt.s32.totalorder %v525, 100
      %vm532 = vcmp.lt.s32.totalorder %v526, 100
      %v533 = vsel %vm527, %v504, 0.0
      %v534 = vsel %vm528, %v505, 0.0
      %v535 = vsel %vm529, %v506, 0.0
      %v536 = vsel %vm530, %v507, 0.0
      %v537 = vsel %vm531, %v508, 0.0
      %v538 = vsel %vm532, %v509, 0.0
      %v539 = vld [vmem:[#allocation2] sm:$0x1]
      %v540 = vadd.f32 %v533, %v534
      %v541 = vadd.f32 %v540, %v535
      %v542 = vadd.f32 %v541, %v536
      %v543 = vadd.f32 %v542, %v537
      %v544 = vadd.f32 %v543, %v538
      %v545 = vrot.slane %v544, 4
      %v546 = vadd.f32 %v544, %v545
      %v547 = vrot.slane %v546, 2
      %v548 = vadd.f32 %v546, %v547
      %v549 = vrot.slane %v548, 1
      %v550 = vadd.f32 %v548, %v549
      %v551 = vadd.f32 %v539, %v550
      %vm552 = vcmask 0
      %553 = vst.msk [vmem:[#allocation2] sm:$0x1] %vm552, %v551
      %p554 = scmp.eq.s32.totalorder %s23, 1
      // Predicated region
      $region41: #{tpu_custom_call.1} parent=35 // pred_check
        %p555 = pneg %p554
      $region42: #{tpu_custom_call.1} parent=35 // pred_check_branch
        %557 = sbr.rel (%p555) target = $region44
      $region43: #{tpu_custom_call.1} parent=35 // pred_region
        %v558 = vld [vmem:[%s3] sm:$0x1]
        %vm559 = vcmask 122880
        %v560 = vsel %vm559, %v558, -inf
        %561 = vmax.xlane.f32.xlu0 %v560
        %v562 = vpop.xlane.xlu0 %561
        %v563 = vsub.f32 %v558, %v562
        %v564 = vmul.f32 %v563, 1.442695
        %v565 = vpow.pop %v564
        %v566 = vsel %vm559, %v565, 0.0
        %567 = vadd.xlane.f32.xlu0 %v566
        %v568 = vpop.xlane.xlu0 %567
        %v569 = vlog2.pop %v568
        %v570 = vmul.f32 %v569, 0.6931472
        %v571 = vadd.f32 %v570, %v562
        %s572 = sld [smem:[#allocation3]]
        %v573 = vstv %s572
        %vm574 = vcmp.eq.s32.totalorder %v455, %v573
        %v575 = vsel %vm574, %v558, 0.0
        %v576 = vsel %vm559, %v575, 0.0
        %577 = vadd.xlane.f32.xlu0 %v576
        %v578 = vpop.xlane.xlu0 %577
        %v579 = vld [vmem:[#allocation2] sm:$0x1]
        %580 = vst.msk [vmem:[%s359] sm:$0x1] %vm552, %v579
        %v581 = vsub.f32 %v571, %v578
        %582 = vst.msk [vmem:[%s362] sm:$0x1] %vm552, %v581
      $region44: #{tpu_custom_call.1} parent=35 // pred_fallthru
        _
      %p583 = scmp.lt.s32.totalorder %s22, 1
      %s584 = scalar_select %p583, %s22, 1
      %s585 = scalar_lea.vmem %s4, %s584
      %p586 = scmp.lt.s32.totalorder %s22, 1
      %s587 = scalar_select %p586, %s22, 1
      %s588 = scalar_lea.vmem %s5, %s587
      // Predicated region
      $region45: #{tpu_custom_call.1} parent=35 // pred_check
        %p589 = pneg %p158
      $region46: #{tpu_custom_call.1} parent=35 // pred_check_branch
        %591 = sbr.rel (%p589) target = $region48
      $region47: #{tpu_custom_call.1} parent=35 // pred_region
        _
      $region48: #{tpu_custom_call.1} parent=35 // pred_fallthru
        _
      // Predicated region
      $region49: #{tpu_custom_call.1} parent=35 // pred_check
        %p592 = pneg %p184
      $region50: #{tpu_custom_call.1} parent=35 // pred_check_branch
        %594 = sbr.rel (%p592) target = $region52
      $region51: #{tpu_custom_call.1} parent=35 // pred_region
        _
      $region52: #{tpu_custom_call.1} parent=35 // pred_fallthru
        _
    $region36: #{tpu_custom_call.1} parent=5 // pred_fallthru
      _
    %p595 = scmp.le.s32.totalorder 2, %s13
    // Predicated region
    $region53: #{tpu_custom_call.1} parent=5 // pred_check
      %p596 = pneg %p595
    $region54: #{tpu_custom_call.1} parent=5 // pred_check_branch
      %598 = sbr.rel (%p596) target = $region56
    $region55: #{tpu_custom_call.1} parent=5 // pred_region
      %s599 = ssub.s32 %s13, 2
      // Predicated region
      $region57: #{tpu_custom_call.1} parent=55 // pred_check
        %p600 = pneg %p164
      $region58: #{tpu_custom_call.1} parent=55 // pred_check_branch
        %602 = sbr.rel (%p600) target = $region60
      $region59: #{tpu_custom_call.1} parent=55 // pred_region
        %p603 = scmp.lt.s32.totalorder %s24, 1
        %s604 = scalar_select %p603, %s24, 1
        %s605 = scalar_lea.vmem %s4, %s604
      $region60: #{tpu_custom_call.1} parent=55 // pred_fallthru
        _
      // Predicated region
      $region61: #{tpu_custom_call.1} parent=55 // pred_check
        %p606 = pneg %p190
      $region62: #{tpu_custom_call.1} parent=55 // pred_check_branch
        %608 = sbr.rel (%p606) target = $region64
      $region63: #{tpu_custom_call.1} parent=55 // pred_region
        %p609 = scmp.lt.s32.totalorder %s24, 1
        %s610 = scalar_select %p609, %s24, 1
        %s611 = scalar_lea.vmem %s5, %s610
      $region64: #{tpu_custom_call.1} parent=55 // pred_fallthru
        _
    $region56: #{tpu_custom_call.1} parent=5 // pred_fallthru
      _
  $region6: #{tpu_custom_call.1} parent=0 // loop_footer
    %s17 = sadd.s32 1, %s13
  $region7: #{tpu_custom_call.1} parent=0 // loop_footer_branch
    %12 = sbr.rel target = $region3
  $region8: #{tpu_custom_call.1} parent=0 // loop_exit
    _

</llo_original>
